<compile_context>
chip_gen: v7x
topology: tpu7x:2x2x1
jax: 0.10.0
libtpu: 0.0.40
codegen_flags: <defaults>
</compile_context>

<pallas_src>
import functools

import jax
import jax.numpy as jnp
from jax.experimental import pallas as pl
from jax.experimental.pallas import tpu as pltpu

NEG_SLOPE = 0.1                      # torch.nn.LeakyReLU(negative_slope=0.1)


def _leaky(x):
    return jnp.where(x > 0, x, NEG_SLOPE * x)


# ---------------------------------------------------------------------------
# Kernel: merged 3x3/s2 (image + depth) conv  +  proj_depth/xyz  +  1x1/s2 fused conv
#   p_ref    : (1, th+1, wo+1, K) packed phases [ee|eo|oe|oo|fused_sub], f32
#   wwin_ref : (4, K, Cout)       per-2x2-window block-diagonal weights, bf16
#   wz_ref   : (1, K)             proj_depth weight (nonzero only on oo-depth lanes), f32
#   wxyz_ref : (K, Cout)          w_fused[xyz rows] at the fused output columns, bf16
#   o_ref    : (1, th, wo, Cout)  Cout = Fi + Fd + Ff
# ---------------------------------------------------------------------------
def _kb_kernel(p_ref, wwin_ref, wz_ref, wxyz_ref, o_ref):
    _, th, wo, cout = o_ref.shape
    k = p_ref.shape[-1]
    m = th * wo

    pv = p_ref[...][0]                                    # (th+1, wo+1, K) f32

    def window(dr, dc):
        # static, unit-stride slice; reshape merges the two major dims only.
        return pv[dr:dr + th, dc:dc + wo, :].reshape(m, k)

    ctr = window(0, 0)                                    # center window = stride-2 pixels
    win00 = ctr.astype(jnp.bfloat16)

    acc = jnp.dot(win00, wwin_ref[0], preferred_element_type=jnp.float32)
    acc = acc + jnp.dot(window(0, 1).astype(jnp.bfloat16), wwin_ref[1],
                        preferred_element_type=jnp.float32)
    acc = acc + jnp.dot(window(1, 0).astype(jnp.bfloat16), wwin_ref[2],
                        preferred_element_type=jnp.float32)
    acc = acc + jnp.dot(window(1, 1).astype(jnp.bfloat16), wwin_ref[3],
                        preferred_element_type=jnp.float32)

    # proj_depth: z = LeakyReLU(<depth, w_proj>) at the stride-2 pixels (f32, VPU + lane reduce)
    z = _leaky(jnp.sum(ctr * wz_ref[...], axis=-1, keepdims=True))      # (m, 1)
    # xyz contribution of the fused branch: z * (coords . w_fused_xyz); columns outside
    # the fused output range are zero in wxyz, so this only touches conv_fused.
    acc = acc + z * jnp.dot(win00, wxyz_ref[...], preferred_element_type=jnp.float32)

    o_ref[...] = _leaky(acc).reshape(1, th, wo, cout).astype(o_ref.dtype)


# ---------------------------------------------------------------------------
# Weight packing: fold the three convolutions into the 4-window / packed-lane layout
# ---------------------------------------------------------------------------
def _build_weights(params, ci, cd, cf):
    w_image = jnp.asarray(params['w_image'], jnp.float32)       # (3, 3, ci, fi)      HWIO
    w_depth = jnp.asarray(params['w_depth'], jnp.float32)       # (3, 3, cd+3, fd)    HWIO
    w_proj = jnp.asarray(params['w_proj'], jnp.float32).reshape(-1)      # (cd,)
    w_fused = jnp.asarray(params['w_fused'], jnp.float32)       # (ci + 3 + cf, ff)

    fi, fd, ff = w_image.shape[-1], w_depth.shape[-1], w_fused.shape[-1]
    assert w_image.shape[:3] == (3, 3, ci)
    assert w_depth.shape[:3] == (3, 3, cd + 3)
    assert w_proj.shape == (cd,)
    assert w_fused.shape[0] == ci + 3 + cf

    cin = ci + cd + 3
    k = 4 * cin + cf
    cout = fi + fd + ff

    wwin = jnp.zeros((4, k, cout), jnp.float32)
    for kh in range(3):
        for kw in range(3):
            iw = (kh // 2) * 2 + (kw // 2)          # which 2x2 output-space window
            b = (kh % 2) * 2 + (kw % 2)             # which packed phase channel block
            base = b * cin
            wwin = wwin.at[iw, base:base + ci, :fi].set(w_image[kh, kw])
            wwin = wwin.at[iw, base + ci:base + cin, fi:fi + fd].set(w_depth[kh, kw])

    oo = 3 * cin                                    # "odd/odd" phase block == stride-2 pixels
    # fused-branch image channels (and optional skip channels) fold into window (0,0)
    wwin = wwin.at[0, oo:oo + ci, fi + fd:].set(w_fused[:ci])
    if cf > 0:
        wwin = wwin.at[0, 4 * cin:4 * cin + cf, fi + fd:].set(w_fused[ci + 3:])

    wz = jnp.zeros((1, k), jnp.float32).at[0, oo + ci:oo + ci + cd].set(w_proj)
    wxyz = jnp.zeros((k, cout), jnp.float32)
    wxyz = wxyz.at[oo + ci + cd:oo + cin, fi + fd:].set(w_fused[ci:ci + 3])

    meta = dict(fi=fi, fd=fd, ff=ff, cin=cin, k=k, cout=cout)
    return wwin.astype(jnp.bfloat16), wz, wxyz.astype(jnp.bfloat16), meta


# ---------------------------------------------------------------------------
# Generation-aware VMEM budget + row-tile selection
# ---------------------------------------------------------------------------
def _pad_up(a, m):
    return ((a + m - 1) // m) * m


def _vmem_limit_bytes():
    cap = 64 * 1024 * 1024           # conservative fallback (v7x per-TC VMEM)
    try:
        info = pltpu.get_tpu_info()
        cap = int(getattr(info, "vmem_capacity_bytes", cap)) or cap
    except Exception:
        pass
    # leave headroom; cap well below physical so double-buffering always fits
    return max(16 * 1024 * 1024, min(int(cap * 0.7), 96 * 1024 * 1024))


def _pick_row_tile(ho, wo, k_lanes, cout, n_batch, budget_bytes):
    kp = _pad_up(k_lanes, 128)
    cp = _pad_up(cout, 128)
    wp1 = _pad_up(wo + 1, 8)
    wp = _pad_up(wo, 8)

    def per_step(th):
        m = th * wo
        in_blk = (th + 1) * wp1 * kp * 4
        out_blk = th * wp * cp * 4
        work = 2 * m * kp * 2 + 2 * m * cp * 4          # live bf16 windows + f32 acc/result
        return 2 * (in_blk + out_blk) + work            # 2x: Pallas double-buffers blocks

    th = 1
    for cand in range(1, ho + 1):
        if per_step(cand) <= budget_bytes:
            th = cand
    # keep enough grid steps for megacore sharding / pipelining (relevant on v7x)
    while th > 16 and n_batch * pl.cdiv(ho, th) < 8:
        th = max(16, (th + 1) // 2)
    return th


# ---------------------------------------------------------------------------
# Wrapper (NCHW in / NCHW out, matching the PyTorch module)
# ---------------------------------------------------------------------------
@functools.partial(jax.jit, static_argnames=("row_tile",))
def calibrated_backprojection_block(image, depth, coordinates, params,
                                    fused=None, row_tile=None):
    """image / depth / coordinates [/ fused] in NCHW; returns NCHW outputs."""
    n, ci, h, w = image.shape
    cd = depth.shape[1]
    assert coordinates.shape == (n, 3, h, w)
    assert h % 2 == 0 and w % 2 == 0, "even spatial dims expected for stride 2"
    ho, wo = h // 2, w // 2                         # Wo is preferably a multiple of 8
    cf = 0 if fused is None else fused.shape[1]

    wwin, wz, wxyz, meta = _build_weights(params, ci, cd, cf)
    fi, fd, k, cout = meta['fi'], meta['fd'], meta['k'], meta['cout']

    # ---- pack input: zero-pad, 2x2 phase-split, all phases (+ subsampled skip
    # channels) on the lane axis -> one DMA per grid step, full-lane MXU operands.
    x = jnp.concatenate([image, depth, coordinates], axis=1).astype(jnp.float32)
    x = jnp.transpose(x, (0, 2, 3, 1))                               # NHWC (n, h, w, cin)
    xp = jnp.pad(x, ((0, 0), (1, 1), (1, 1), (0, 0)))
    parts = [xp[:, 0::2, 0::2, :], xp[:, 0::2, 1::2, :],
             xp[:, 1::2, 0::2, :], xp[:, 1::2, 1::2, :]]             # each (n, ho+1, wo+1, cin)
    if cf > 0:
        fs = jnp.transpose(fused.astype(jnp.float32), (0, 2, 3, 1))[:, ::2, ::2, :]
        parts.append(jnp.pad(fs, ((0, 0), (0, 1), (0, 1), (0, 0))))  # (n, ho+1, wo+1, cf)
    packed = jnp.concatenate(parts, axis=-1)                         # (n, ho+1, wo+1, K)

    # ---- row tiling (no divisibility requirement; last tile padded)
    vmem_limit = _vmem_limit_bytes()
    if row_tile is None:
        th = _pick_row_tile(ho, wo, k, cout, n, budget_bytes=vmem_limit // 2)
    else:
        th = max(1, min(int(row_tile), ho))
    t = pl.cdiv(ho, th)
    ho_pad = t * th

    packed = jnp.pad(packed, ((0, 0), (0, ho_pad - ho), (0, 0), (0, 0)))   # rows -> ho_pad+1
    # overlapping (th+1)-row tiles built in the wrapper: no halo DMAs / concats in-kernel
    main = packed[:, :ho_pad].reshape(n, t, th, wo + 1, k)
    halo = packed[:, th::th][:, :, None]                                   # (n, t, 1, wo+1, K)
    p_ov = jnp.concatenate([main, halo], axis=2).reshape(n, t * (th + 1), wo + 1, k)

    out = pl.pallas_call(
        _kb_kernel,
        out_shape=jax.ShapeDtypeStruct((n, ho_pad, wo, cout), jnp.float32),
        grid=(n, t),
        in_specs=[
            pl.BlockSpec((1, th + 1, wo + 1, k), lambda i, j: (i, j, 0, 0)),
            pl.BlockSpec((4, k, cout), lambda i, j: (0, 0, 0)),
            pl.BlockSpec((1, k), lambda i, j: (0, 0)),
            pl.BlockSpec((k, cout), lambda i, j: (0, 0)),
        ],
        out_specs=pl.BlockSpec((1, th, wo, cout), lambda i, j: (i, j, 0, 0)),
        compiler_params=pltpu.CompilerParams(
            dimension_semantics=("parallel", "parallel"),
            vmem_limit_bytes=vmem_limit),
    )(p_ov, wwin, wz, wxyz)

    out = jnp.transpose(out[:, :ho], (0, 3, 1, 2))                   # NCHW (n, cout, ho, wo)
    return out[:, :fi], out[:, fi:fi + fd], out[:, fi + fd:]


# ---------------------------------------------------------------------------
# Deterministic synthetic parameter init (shapes per the module's __init__)
# ---------------------------------------------------------------------------
def init_params(key, in_channels_image, in_channels_depth, in_channels_fused,
                n_filter_image=16, n_filter_depth=8, n_filter_fused=16):
    keys = jax.random.split(key, 4)

    def uni(kk, shape, fan_in):
        bound = 1.0 / float(fan_in) ** 0.5
        return jax.random.uniform(kk, shape, jnp.float32, -bound, bound)

    return dict(
        w_image=uni(keys[0], (3, 3, in_channels_image, n_filter_image),
                    9 * in_channels_image),
        w_depth=uni(keys[1], (3, 3, in_channels_depth + 3, n_filter_depth),
                    9 * (in_channels_depth + 3)),
        w_proj=uni(keys[2], (in_channels_depth,), in_channels_depth),
        w_fused=uni(keys[3], (in_channels_fused + 3, n_filter_fused),
                    in_channels_fused + 3),
    )


# ---------------------------------------------------------------------------
# Pure-JAX reference (f32, HIGHEST) for correctness checking
# ---------------------------------------------------------------------------
def reference(image, depth, coordinates, params, fused=None):
    def conv(x, w_hwio, stride, padding):
        return jax.lax.conv_general_dilated(
            x, w_hwio, window_strides=(stride, stride),
            padding=[(padding, padding), (padding, padding)],
            dimension_numbers=('NCHW', 'HWIO', 'NCHW'),
            precision=jax.lax.Precision.HIGHEST)

    conv_image = _leaky(conv(image, params['w_image'], 2, 1))
    conv_depth = _leaky(
        conv(jnp.concatenate([depth, coordinates], axis=1), params['w_depth'], 2, 1))
    z = _leaky(conv(depth, params['w_proj'].reshape(1, 1, -1, 1), 1, 0))
    xyz = coordinates * z
    layers = [image, xyz] + ([fused] if fused is not None else [])
    w_fused = params['w_fused'].reshape(1, 1, *params['w_fused'].shape)
    conv_fused = _leaky(conv(jnp.concatenate(layers, axis=1), w_fused, 2, 0))
    return conv_image, conv_depth, conv_fused


def _check(outs, refs, tol=5e-2):
    # bf16 MXU operands (f32 accumulate) vs f32/HIGHEST reference -> loosened tolerance
    for name, o, r in zip(("conv_image", "conv_depth", "conv_fused"), outs, refs):
        assert o.shape == r.shape, (name, o.shape, r.shape)
        err = float(jnp.max(jnp.abs(o - r)))
        assert err < tol, (name, err)


if __name__ == "__main__":
    key = jax.random.PRNGKey(0)
    k = jax.random.split(key, 8)

    # --- case 1: no fused input, single row tile (Ho = Wo = 8) ---
    N, CI, CD, H, W = 2, 3, 2, 16, 16
    image = jax.random.normal(k[0], (N, CI, H, W), jnp.float32)
    depth = jax.random.normal(k[1], (N, CD, H, W), jnp.float32)
    coords = jax.random.normal(k[2], (N, 3, H, W), jnp.float32)
    params = init_params(k[3], CI, CD, CI,
                         n_filter_image=16, n_filter_depth=8, n_filter_fused=16)

    outs = jax.block_until_ready(
        calibrated_backprojection_block(image, depth, coords, params))
    _check(outs, reference(image, depth, coords, params))

    # --- case 2: with fused input, multi-tile row grid (Ho = 16, row_tile = 8 -> 2 tiles) ---
    H2 = W2 = 32
    CF = 5
    image2 = jax.random.normal(k[4], (N, CI, H2, W2), jnp.float32)
    depth2 = jax.random.normal(k[5], (N, CD, H2, W2), jnp.float32)
    coords2 = jax.random.normal(k[6], (N, 3, H2, W2), jnp.float32)
    fused2 = jax.random.normal(k[7], (N, CF, H2, W2), jnp.float32)
    params2 = init_params(k[3], CI, CD, CI + CF,
                          n_filter_image=16, n_filter_depth=8, n_filter_fused=16)

    outs2 = jax.block_until_ready(
        calibrated_backprojection_block(image2, depth2, coords2, params2,
                                        fused=fused2, row_tile=8))
    _check(outs2, reference(image2, depth2, coords2, params2, fused=fused2))

    print("KERNEL_OK")
</pallas_src>

<mosaic_0001>
module attributes {stable_mosaic.version = 11 : i64} {
  func.func @_kb_kernel(%arg0: i32, %arg1: i32, %arg2: memref<1x9x9x32xf32, #tpu.memory_space<vmem>>, %arg3: memref<4x32x40xbf16, #tpu.memory_space<vmem>>, %arg4: memref<1x32xf32, #tpu.memory_space<vmem>>, %arg5: memref<32x40xbf16, #tpu.memory_space<vmem>>, %arg6: memref<1x8x8x40xf32, #tpu.memory_space<vmem>>) attributes {dimension_semantics = [#tpu.dimension_semantics<parallel>, #tpu.dimension_semantics<parallel>], iteration_bounds = array<i64: 2, 1>, scalar_prefetch = 0 : i64, scratch_operands = 0 : i64, tpu.core_type = #tpu.core_type<tc>, window_params = [{transform_indices = @transform_0, window_bounds = array<i64: 1, 9, 9, 32>}, {pipeline_mode = #tpu.pipeline_mode<synchronous>, transform_indices = @transform_1, window_bounds = array<i64: 4, 32, 40>}, {pipeline_mode = #tpu.pipeline_mode<synchronous>, transform_indices = @transform_2, window_bounds = array<i64: 1, 32>}, {pipeline_mode = #tpu.pipeline_mode<synchronous>, transform_indices = @transform_3, window_bounds = array<i64: 32, 40>}, {transform_indices = @transform_4, window_bounds = array<i64: 1, 8, 8, 40>}]} {
    %c0 = arith.constant 0 : index
    %c0_0 = arith.constant 0 : index
    %c0_1 = arith.constant 0 : index
    %c0_2 = arith.constant 0 : index
    %0 = vector.load %arg2[%c0, %c0_0, %c0_1, %c0_2] : memref<1x9x9x32xf32, #tpu.memory_space<vmem>>, vector<1x9x9x32xf32>
    %1 = vector.shape_cast %0 : vector<1x9x9x32xf32> to vector<9x9x32xf32>
    %2 = vector.extract_strided_slice %1 {offsets = [0, 0, 0], sizes = [8, 8, 32], strides = [1, 1, 1]} : vector<9x9x32xf32> to vector<8x8x32xf32>
    %3 = vector.shape_cast %2 : vector<8x8x32xf32> to vector<64x32xf32>
    %4 = arith.truncf %3 : vector<64x32xf32> to vector<64x32xbf16>
    %c0_3 = arith.constant 0 : index
    %c0_4 = arith.constant 0 : index
    %c0_5 = arith.constant 0 : index
    %5 = vector.load %arg3[%c0_3, %c0_4, %c0_5] : memref<4x32x40xbf16, #tpu.memory_space<vmem>>, vector<1x32x40xbf16>
    %6 = vector.shape_cast %5 : vector<1x32x40xbf16> to vector<32x40xbf16>
    %cst = arith.constant dense<0.000000e+00> : vector<64x40xf32>
    %7 = tpu.matmul %4, %6, %cst {dimension_numbers = #tpu.dot_dimension_numbers<[1], [0], [0], [1], [0, 0, 1, 1], [], []>} : vector<64x32xbf16>, vector<32x40xbf16>, vector<64x40xf32> -> vector<64x40xf32>
    %8 = vector.extract_strided_slice %1 {offsets = [0, 1, 0], sizes = [8, 8, 32], strides = [1, 1, 1]} : vector<9x9x32xf32> to vector<8x8x32xf32>
    %9 = vector.shape_cast %8 : vector<8x8x32xf32> to vector<64x32xf32>
    %10 = arith.truncf %9 : vector<64x32xf32> to vector<64x32xbf16>
    %c1 = arith.constant 1 : index
    %c0_6 = arith.constant 0 : index
    %c0_7 = arith.constant 0 : index
    %11 = vector.load %arg3[%c1, %c0_6, %c0_7] : memref<4x32x40xbf16, #tpu.memory_space<vmem>>, vector<1x32x40xbf16>
    %12 = vector.shape_cast %11 : vector<1x32x40xbf16> to vector<32x40xbf16>
    %cst_8 = arith.constant dense<0.000000e+00> : vector<64x40xf32>
    %13 = tpu.matmul %10, %12, %cst_8 {dimension_numbers = #tpu.dot_dimension_numbers<[1], [0], [0], [1], [0, 0, 1, 1], [], []>} : vector<64x32xbf16>, vector<32x40xbf16>, vector<64x40xf32> -> vector<64x40xf32>
    %14 = arith.addf %7, %13 : vector<64x40xf32>
    %15 = vector.extract_strided_slice %1 {offsets = [1, 0, 0], sizes = [8, 8, 32], strides = [1, 1, 1]} : vector<9x9x32xf32> to vector<8x8x32xf32>
    %16 = vector.shape_cast %15 : vector<8x8x32xf32> to vector<64x32xf32>
    %17 = arith.truncf %16 : vector<64x32xf32> to vector<64x32xbf16>
    %c2 = arith.constant 2 : index
    %c0_9 = arith.constant 0 : index
    %c0_10 = arith.constant 0 : index
    %18 = vector.load %arg3[%c2, %c0_9, %c0_10] : memref<4x32x40xbf16, #tpu.memory_space<vmem>>, vector<1x32x40xbf16>
    %19 = vector.shape_cast %18 : vector<1x32x40xbf16> to vector<32x40xbf16>
    %cst_11 = arith.constant dense<0.000000e+00> : vector<64x40xf32>
    %20 = tpu.matmul %17, %19, %cst_11 {dimension_numbers = #tpu.dot_dimension_numbers<[1], [0], [0], [1], [0, 0, 1, 1], [], []>} : vector<64x32xbf16>, vector<32x40xbf16>, vector<64x40xf32> -> vector<64x40xf32>
    %21 = arith.addf %14, %20 : vector<64x40xf32>
    %22 = vector.extract_strided_slice %1 {offsets = [1, 1, 0], sizes = [8, 8, 32], strides = [1, 1, 1]} : vector<9x9x32xf32> to vector<8x8x32xf32>
    %23 = vector.shape_cast %22 : vector<8x8x32xf32> to vector<64x32xf32>
    %24 = arith.truncf %23 : vector<64x32xf32> to vector<64x32xbf16>
    %c3 = arith.constant 3 : index
    %c0_12 = arith.constant 0 : index
    %c0_13 = arith.constant 0 : index
    %25 = vector.load %arg3[%c3, %c0_12, %c0_13] : memref<4x32x40xbf16, #tpu.memory_space<vmem>>, vector<1x32x40xbf16>
    %26 = vector.shape_cast %25 : vector<1x32x40xbf16> to vector<32x40xbf16>
    %cst_14 = arith.constant dense<0.000000e+00> : vector<64x40xf32>
    %27 = tpu.matmul %24, %26, %cst_14 {dimension_numbers = #tpu.dot_dimension_numbers<[1], [0], [0], [1], [0, 0, 1, 1], [], []>} : vector<64x32xbf16>, vector<32x40xbf16>, vector<64x40xf32> -> vector<64x40xf32>
    %28 = arith.addf %21, %27 : vector<64x40xf32>
    %c0_15 = arith.constant 0 : index
    %c0_16 = arith.constant 0 : index
    %29 = vector.load %arg4[%c0_15, %c0_16] : memref<1x32xf32, #tpu.memory_space<vmem>>, vector<1x32xf32>
    %30 = vector.broadcast %29 : vector<1x32xf32> to vector<64x32xf32>
    %31 = arith.mulf %3, %30 : vector<64x32xf32>
    %cst_17 = arith.constant dense<0.000000e+00> : vector<64xf32>
    %32 = vector.multi_reduction <add>, %31, %cst_17 [1] : vector<64x32xf32> to vector<64xf32>
    %33 = vector.shape_cast %32 : vector<64xf32> to vector<64x1xf32>
    %cst_18 = arith.constant 0.000000e+00 : f32
    %34 = vector.broadcast %cst_18 : f32 to vector<64x1xf32>
    %35 = arith.cmpf ogt, %33, %34 : vector<64x1xf32>
    %cst_19 = arith.constant 1.000000e-01 : f32
    %36 = vector.broadcast %cst_19 : f32 to vector<64x1xf32>
    %37 = arith.mulf %36, %33 : vector<64x1xf32>
    %38 = arith.select %35, %33, %37 : vector<64x1xi1>, vector<64x1xf32>
    %c0_20 = arith.constant 0 : index
    %c0_21 = arith.constant 0 : index
    %39 = vector.load %arg5[%c0_20, %c0_21] : memref<32x40xbf16, #tpu.memory_space<vmem>>, vector<32x40xbf16>
    %cst_22 = arith.constant dense<0.000000e+00> : vector<64x40xf32>
    %40 = tpu.matmul %4, %39, %cst_22 {dimension_numbers = #tpu.dot_dimension_numbers<[1], [0], [0], [1], [0, 0, 1, 1], [], []>} : vector<64x32xbf16>, vector<32x40xbf16>, vector<64x40xf32> -> vector<64x40xf32>
    %41 = vector.broadcast %38 : vector<64x1xf32> to vector<64x40xf32>
    %42 = arith.mulf %41, %40 : vector<64x40xf32>
    %43 = arith.addf %28, %42 : vector<64x40xf32>
    %cst_23 = arith.constant 0.000000e+00 : f32
    %44 = vector.broadcast %cst_23 : f32 to vector<64x40xf32>
    %45 = arith.cmpf ogt, %43, %44 : vector<64x40xf32>
    %cst_24 = arith.constant 1.000000e-01 : f32
    %46 = vector.broadcast %cst_24 : f32 to vector<64x40xf32>
    %47 = arith.mulf %46, %43 : vector<64x40xf32>
    %48 = arith.select %45, %43, %47 : vector<64x40xi1>, vector<64x40xf32>
    %49 = vector.shape_cast %48 : vector<64x40xf32> to vector<1x8x8x40xf32>
    %c0_25 = arith.constant 0 : index
    %c0_26 = arith.constant 0 : index
    %c0_27 = arith.constant 0 : index
    %c0_28 = arith.constant 0 : index
    %50 = vector.load %arg6[%c0_25, %c0_26, %c0_27, %c0_28] : memref<1x8x8x40xf32, #tpu.memory_space<vmem>>, vector<1x8x8x40xf32>
    tpu.vector_store %arg6[%c0_25, %c0_26, %c0_27, %c0_28], %49 {strides = array<i32>} : memref<1x8x8x40xf32, #tpu.memory_space<vmem>>, vector<1x8x8x40xf32>,
    return
  }
  func.func @transform_0(%arg0: i32, %arg1: i32) -> (i32, i32, i32, i32) {
    %c0_i32 = arith.constant 0 : i32
    %c0_i32_0 = arith.constant 0 : i32
    %c0_i32_1 = arith.constant 0 : i32
    return %arg0, %arg1, %c0_i32, %c0_i32_0 : i32, i32, i32, i32
  }
  func.func @transform_1(%arg0: i32, %arg1: i32) -> (i32, i32, i32) {
    %c0_i32 = arith.constant 0 : i32
    %c0_i32_0 = arith.constant 0 : i32
    %c0_i32_1 = arith.constant 0 : i32
    %c0_i32_2 = arith.constant 0 : i32
    return %c0_i32, %c0_i32_0, %c0_i32_1 : i32, i32, i32
  }
  func.func @transform_2(%arg0: i32, %arg1: i32) -> (i32, i32) {
    %c0_i32 = arith.constant 0 : i32
    %c0_i32_0 = arith.constant 0 : i32
    %c0_i32_1 = arith.constant 0 : i32
    return %c0_i32, %c0_i32_0 : i32, i32
  }
  func.func @transform_3(%arg0: i32, %arg1: i32) -> (i32, i32) {
    %c0_i32 = arith.constant 0 : i32
    %c0_i32_0 = arith.constant 0 : i32
    %c0_i32_1 = arith.constant 0 : i32
    return %c0_i32, %c0_i32_0 : i32, i32
  }
  func.func @transform_4(%arg0: i32, %arg1: i32) -> (i32, i32, i32, i32) {
    %c0_i32 = arith.constant 0 : i32
    %c0_i32_0 = arith.constant 0 : i32
    %c0_i32_1 = arith.constant 0 : i32
    return %arg0, %arg1, %c0_i32, %c0_i32_0 : i32, i32, i32, i32
  }
}

</mosaic_0001>

<llo_original>
// kernel: calibrated_backprojection_block.1
$region0: #{calibrated_backprojection_block.1}
  #allocation0 [shape = 'u32[]', space=smem, size = 0x4, offset = 0x4, fixed_abs, tag = 'smem constant byte address 0x4 - core index']
  #allocation1 [shape = 'u32[144,128]{1,0:T(1,128)}', space=vmem, size = 0x12000, scoped, tag = 'internal scratch']
  %s0 = inlined_call_operand.vmem [shape: f32[2,9,9,32], index: 0, kind: input, shape index: {}]
  %s1 = inlined_call_operand.vmem [shape: bf16[4,32,40], index: 1, kind: input, shape index: {}]
  %s2 = inlined_call_operand.vmem [shape: f32[1,32], index: 2, kind: input, shape index: {}]
  %s3 = inlined_call_operand.vmem [shape: bf16[32,40], index: 3, kind: input, shape index: {}]
  %s4 = inlined_call_operand.vmem [shape: f32[2,8,8,40], index: 4, kind: output, shape index: {}]
  %s5 = sld [smem:[#allocation0]]
  $region49: #{calibrated_backprojection_block.1} parent=0
    _
  %s7 = ssub.s32 1, %s5
  %s8 = scalar_select 0, %s7, %s5
  loop: start=0, step=1, limit=4
  $region2: #{calibrated_backprojection_block.1} parent=0 // loop_pre_header
    _
  $region3: #{calibrated_backprojection_block.1} parent=0 // loop_header
    %s10 = sphi 0, %s14
    %p11 = scmp.ge.s32.totalorder %s10, 4
    %s17 = sphi 0, %s29
    %s18 = sphi 0, %s25
    %s19 = sphi 0, %s17
    %s20 = sphi 0, %s18
    %s21 = sphi 0, %s19
    %s22 = sphi 0, %s20
    %s34 = sphi 0, %s36
    %s37 = sphi 0, %s34
    %s38 = sphi 0, %s37
    %s54 = sphi 0, %s38
    %s58 = sphi 0, %s58
    %s60 = sphi 0, %s58
    %s61 = sphi 0, %s60
    %s75 = sphi 0, %s61
    %s79 = sphi 0, %s79
    %s81 = sphi 0, %s79
    %s82 = sphi 0, %s81
    %s96 = sphi 0, %s82
    %s100 = sphi 0, %s100
    %s102 = sphi 0, %s100
    %s103 = sphi 0, %s102
    %s117 = sphi 0, %s103
    %s125 = sphi 0, %s127
    %s128 = sphi 0, %s125
    %s129 = sphi 0, %s128
    %s145 = sphi 0, %s129
  $region4: #{calibrated_backprojection_block.1} parent=0 // loop_header_branch
    %13 = sbr.rel (%p11) target = $region8
  $region5: #{calibrated_backprojection_block.1} parent=0 // loop_body
    %s15 = ssub.s32 %s10, 1
    %s16 = ssub.s32 %s10, 2
    %s23 = sadd.s32 1, %s18
    %p24 = scmp.ge.s32.totalorder %s23, 1
    %s25 = scalar_select %p24, 0, %s23
    %s26 = sadd.s32 1, %s17
    %s27 = scalar_select %p24, %s26, %s17
    %p28 = scmp.ge.s32.totalorder %s27, 2
    %s29 = scalar_select %p28, 0, %s27
    %s30 = ssub.s32 %s17, %s29
    %s31 = ssub.s32 %s18, %s25
    %s32 = sor.u32 %s30, %s31
    %p33 = scmp.eq.s32.totalorder %s32, 0
    %s35 = sadd.s32 %s34, 1
    %s36 = scalar_select %p33, %s34, %s35
    %p39 = pneg %p33
    %p40 = scmp.eq.s32.totalorder %s10, 1
    %p41 = por %p39, %p40
    %p42 = scmp.ne.s32.totalorder %s34, %s37
    %p43 = scmp.eq.s32.totalorder %s10, 0
    %p44 = por %p42, %p43
    %p45 = scmp.ne.s32.totalorder %s34, %s37
    %p46 = scmp.eq.s32.totalorder %s15, 1
    %p47 = por %p45, %p46
    %p48 = scmp.ne.s32.totalorder %s37, %s38
    %p49 = scmp.eq.s32.totalorder %s15, 0
    %p50 = por %p48, %p49
    %p51 = scmp.ne.s32.totalorder %s37, %s38
    %p52 = scmp.eq.s32.totalorder %s16, 1
    %p53 = por %p51, %p52
    %p55 = scmp.ne.s32.totalorder %s38, %s54
    %p56 = scmp.eq.s32.totalorder %s16, 0
    %p57 = por %p55, %p56
    %s59 = sadd.s32 %s58, 1
    %p62 = scmp.eq.s32.totalorder %s10, 1
    %p63 = scmp.ne.s32.totalorder %s58, %s60
    %p64 = scmp.eq.s32.totalorder %s10, 0
    %p65 = por %p63, %p64
    %p66 = scmp.ne.s32.totalorder %s58, %s60
    %p67 = scmp.eq.s32.totalorder %s15, 1
    %p68 = por %p66, %p67
    %p69 = scmp.ne.s32.totalorder %s60, %s61
    %p70 = scmp.eq.s32.totalorder %s15, 0
    %p71 = por %p69, %p70
    %p72 = scmp.ne.s32.totalorder %s60, %s61
    %p73 = scmp.eq.s32.totalorder %s16, 1
    %p74 = por %p72, %p73
    %p76 = scmp.ne.s32.totalorder %s61, %s75
    %p77 = scmp.eq.s32.totalorder %s16, 0
    %p78 = por %p76, %p77
    %s80 = sadd.s32 %s79, 1
    %p83 = scmp.eq.s32.totalorder %s10, 1
    %p84 = scmp.ne.s32.totalorder %s79, %s81
    %p85 = scmp.eq.s32.totalorder %s10, 0
    %p86 = por %p84, %p85
    %p87 = scmp.ne.s32.totalorder %s79, %s81
    %p88 = scmp.eq.s32.totalorder %s15, 1
    %p89 = por %p87, %p88
    %p90 = scmp.ne.s32.totalorder %s81, %s82
    %p91 = scmp.eq.s32.totalorder %s15, 0
    %p92 = por %p90, %p91
    %p93 = scmp.ne.s32.totalorder %s81, %s82
    %p94 = scmp.eq.s32.totalorder %s16, 1
    %p95 = por %p93, %p94
    %p97 = scmp.ne.s32.totalorder %s82, %s96
    %p98 = scmp.eq.s32.totalorder %s16, 0
    %p99 = por %p97, %p98
    %s101 = sadd.s32 %s100, 1
    %p104 = scmp.eq.s32.totalorder %s10, 1
    %p105 = scmp.ne.s32.totalorder %s100, %s102
    %p106 = scmp.eq.s32.totalorder %s10, 0
    %p107 = por %p105, %p106
    %p108 = scmp.ne.s32.totalorder %s100, %s102
    %p109 = scmp.eq.s32.totalorder %s15, 1
    %p110 = por %p108, %p109
    %p111 = scmp.ne.s32.totalorder %s102, %s103
    %p112 = scmp.eq.s32.totalorder %s15, 0
    %p113 = por %p111, %p112
    %p114 = scmp.ne.s32.totalorder %s102, %s103
    %p115 = scmp.eq.s32.totalorder %s16, 1
    %p116 = por %p114, %p115
    %p118 = scmp.ne.s32.totalorder %s103, %s117
    %p119 = scmp.eq.s32.totalorder %s16, 0
    %p120 = por %p118, %p119
    %s121 = ssub.s32 %s17, %s29
    %s122 = ssub.s32 %s18, %s25
    %s123 = sor.u32 %s121, %s122
    %p124 = scmp.eq.s32.totalorder %s123, 0
    %s126 = sadd.s32 %s125, 1
    %s127 = scalar_select %p124, %s125, %s126
    %p130 = pneg %p124
    %p131 = scmp.eq.s32.totalorder %s10, 1
    %p132 = por %p130, %p131
    %p133 = scmp.ne.s32.totalorder %s125, %s128
    %p134 = scmp.eq.s32.totalorder %s10, 0
    %p135 = por %p133, %p134
    %p136 = scmp.ne.s32.totalorder %s125, %s128
    %p137 = scmp.eq.s32.totalorder %s15, 1
    %p138 = por %p136, %p137
    %p139 = scmp.ne.s32.totalorder %s128, %s129
    %p140 = scmp.eq.s32.totalorder %s15, 0
    %p141 = por %p139, %p140
    %p142 = scmp.ne.s32.totalorder %s128, %s129
    %p143 = scmp.eq.s32.totalorder %s16, 1
    %p144 = por %p142, %p143
    %p146 = scmp.ne.s32.totalorder %s129, %s145
    %p147 = scmp.eq.s32.totalorder %s16, 0
    %p148 = por %p146, %p147
    %p149 = scmp.le.s32.totalorder 1, %s10
    %p150 = scmp.lt.s32.totalorder %s10, 3
    %p151 = pnand %p149, %p150
    %p152 = pneg %p151
    // Predicated region
    $region9: #{calibrated_backprojection_block.1} parent=5 // pred_check
      _
    $region10: #{calibrated_backprojection_block.1} parent=5 // pred_check_branch
      %154 = sbr.rel (%p151) target = $region12
    $region11: #{calibrated_backprojection_block.1} parent=5 // pred_region
      %s155 = ssub.s32 %s10, 1
      // Predicated region
      $region13: #{calibrated_backprojection_block.1} parent=11 // pred_check
        %p156 = pneg %p71
      $region14: #{calibrated_backprojection_block.1} parent=11 // pred_check_branch
        %158 = sbr.rel (%p156) target = $region16
      $region15: #{calibrated_backprojection_block.1} parent=11 // pred_region
        _
      $region16: #{calibrated_backprojection_block.1} parent=11 // pred_fallthru
        _
      // Predicated region
      $region17: #{calibrated_backprojection_block.1} parent=11 // pred_check
        %p159 = pneg %p92
      $region18: #{calibrated_backprojection_block.1} parent=11 // pred_check_branch
        %161 = sbr.rel (%p159) target = $region20
      $region19: #{calibrated_backprojection_block.1} parent=11 // pred_region
        _
      $region20: #{calibrated_backprojection_block.1} parent=11 // pred_fallthru
        _
      // Predicated region
      $region21: #{calibrated_backprojection_block.1} parent=11 // pred_check
        %p162 = pneg %p113
      $region22: #{calibrated_backprojection_block.1} parent=11 // pred_check_branch
        %164 = sbr.rel (%p162) target = $region24
      $region23: #{calibrated_backprojection_block.1} parent=11 // pred_region
        _
      $region24: #{calibrated_backprojection_block.1} parent=11 // pred_fallthru
        _
    $region12: #{calibrated_backprojection_block.1} parent=5 // pred_fallthru
      _
    %p165 = scmp.lt.s32.totalorder %s10, 2
    // Predicated region
    $region25: #{calibrated_backprojection_block.1} parent=5 // pred_check
      %p166 = pneg %p165
    $region26: #{calibrated_backprojection_block.1} parent=5 // pred_check_branch
      %168 = sbr.rel (%p166) target = $region28
    $region27: #{calibrated_backprojection_block.1} parent=5 // pred_region
      // Predicated region
      $region29: #{calibrated_backprojection_block.1} parent=27 // pred_check
        %p169 = pneg %p44
      $region30: #{calibrated_backprojection_block.1} parent=27 // pred_check_branch
        %171 = sbr.rel (%p169) target = $region32
      $region31: #{calibrated_backprojection_block.1} parent=27 // pred_region
        %s172 = smul.u32 9, %s18
        %p173 = scmp.lt.s32.totalorder %s17, 1
        %s174 = scalar_select %p173, %s17, 1
        %p175 = scmp.lt.s32.totalorder %s172, 8
        %s176 = scalar_select %p175, %s172, 8
        %s177 = smul.addr %s176, 2
        %s178 = smul.addr %s174, 18
        %s179 = sadd.s32 %s177, %s178
        %s180 = smul.addr %s179, 8
        %s181 = scalar_lea.vmem %s0, %s180
        %s182 = smul.u32 9, %s18
      $region32: #{calibrated_backprojection_block.1} parent=27 // pred_fallthru
        _
    $region28: #{calibrated_backprojection_block.1} parent=5 // pred_fallthru
      _
    %p183 = scmp.le.s32.totalorder 1, %s10
    %p184 = scmp.lt.s32.totalorder %s10, 3
    %p185 = pnand %p183, %p184
    %p186 = pneg %p185
    // Predicated region
    $region33: #{calibrated_backprojection_block.1} parent=5 // pred_check
      _
    $region34: #{calibrated_backprojection_block.1} parent=5 // pred_check_branch
      %188 = sbr.rel (%p185) target = $region36
    $region35: #{calibrated_backprojection_block.1} parent=5 // pred_region
      %s189 = ssub.s32 %s10, 1
      %s190 = smul.u32 9, %s20
      %p191 = scmp.lt.s32.totalorder %s19, 1
      %s192 = scalar_select %p191, %s19, 1
      %p193 = scmp.lt.s32.totalorder %s190, 8
      %s194 = scalar_select %p193, %s190, 8
      %s195 = smul.addr %s194, 2
      %s196 = smul.addr %s192, 18
      %s197 = sadd.s32 %s195, %s196
      %s198 = smul.addr %s197, 8
      %s199 = scalar_lea.vmem %s0, %s198
      %p200 = pneg %p50
      %p201 = pneg %p47
      %p202 = pneg %p71
      %p203 = pneg %p68
      %p204 = pneg %p92
      %p205 = pneg %p89
      %p206 = pneg %p113
      %p207 = pneg %p110
      %p208 = pneg %p141
      %p209 = pneg %p138
      %s210 = smul.u32 8, %s20
      %p211 = scmp.lt.s32.totalorder %s19, 1
      %s212 = scalar_select %p211, %s19, 1
      %p213 = scmp.lt.s32.totalorder %s210, 7
      %s214 = scalar_select %p213, %s210, 7
      %s215 = smul.addr %s212, 8
      %s216 = sadd.s32 %s214, %s215
      %s217 = smul.addr %s216, 8
      %s218 = scalar_lea.vmem %s4, %s217
      %s219 = smul.u32 9, %s20
      %p220 = scmp.lt.s32.totalorder %s19, 1
      %s221 = scalar_select %p220, %s19, 1
      %p222 = scmp.lt.s32.totalorder %s219, 8
      %s223 = scalar_select %p222, %s219, 8
      %s224 = smul.addr %s223, 2
      %s225 = smul.addr %s221, 18
      %s226 = sadd.s32 %s224, %s225
      %s227 = smul.addr %s226, 8
      %s228 = scalar_lea.vmem %s0, %s227
      %s229 = smul.u32 9, %s20
      %s230 = smul.u32 8, %s20
      %p231 = scmp.lt.s32.totalorder %s19, 1
      %s232 = scalar_select %p231, %s19, 1
      %p233 = scmp.lt.s32.totalorder %s230, 7
      %s234 = scalar_select %p233, %s230, 7
      %s235 = smul.addr %s232, 8
      %s236 = sadd.s32 %s234, %s235
      %s237 = smul.addr %s236, 8
      %s238 = scalar_lea.vmem %s4, %s237
      %s239 = smul.u32 8, %s20
      %v241 = vld [vmem:[%s228] sm:$0xff]
      %v242 = vld [vmem:[%s228 + $0x8] sm:$0x1]
      %v243 = vld [vmem:[%s228 + $0x10] sm:$0xff]
      %v244 = vld [vmem:[%s228 + $0x18] sm:$0x1]
      %v245 = vld [vmem:[%s228 + $0x20] sm:$0xff]
      %v246 = vld [vmem:[%s228 + $0x28] sm:$0x1]
      %v247 = vld [vmem:[%s228 + $0x30] sm:$0xff]
      %v248 = vld [vmem:[%s228 + $0x38] sm:$0x1]
      %v249 = vld [vmem:[%s228 + $0x40] sm:$0xff]
      %v250 = vld [vmem:[%s228 + $0x48] sm:$0x1]
      %v251 = vld [vmem:[%s228 + $0x50] sm:$0xff]
      %v252 = vld [vmem:[%s228 + $0x58] sm:$0x1]
      %v253 = vld [vmem:[%s228 + $0x60] sm:$0xff]
      %v254 = vld [vmem:[%s228 + $0x68] sm:$0x1]
      %v255 = vld [vmem:[%s228 + $0x70] sm:$0xff]
      %v256 = vld [vmem:[%s228 + $0x78] sm:$0x1]
      %v257 = vld [vmem:[%s228 + $0x80] sm:$0xff]
      %v258 = vld [vmem:[%s228 + $0x88] sm:$0x1]
      %v259 = vpack.c.bf16 %v243, %v241
      %v260 = vpack.c.bf16 %v247, %v245
      %v261 = vpack.c.bf16 %v251, %v249
      %v262 = vpack.c.bf16 %v255, %v253
      %v263 = vld [vmem:[%s1] sm:$0xf]
      %v264 = vld [vmem:[%s1 + $0x4] sm:$0xf]
      %v265 = vld [vmem:[%s1 + $0x8] sm:$0xf]
      %v266 = vld [vmem:[%s1 + $0xc] sm:$0xf]
      %vm283 = vcmask 1046528
      %v284 = vrot.slane %v241, 1
      %v285 = vrot.slane %v242, 1
      %v286 = vsel %vm283, %v284, %v285
      %v287 = vrot.slane %v243, 1
      %v288 = vrot.slane %v244, 1
      %v289 = vsel %vm283, %v287, %v288
      %v290 = vrot.slane %v245, 1
      %v291 = vrot.slane %v246, 1
      %v292 = vsel %vm283, %v290, %v291
      %v293 = vrot.slane %v247, 1
      %v294 = vrot.slane %v248, 1
      %v295 = vsel %vm283, %v293, %v294
      %v296 = vrot.slane %v249, 1
      %v297 = vrot.slane %v250, 1
      %v298 = vsel %vm283, %v296, %v297
      %v299 = vrot.slane %v251, 1
      %v300 = vrot.slane %v252, 1
      %v301 = vsel %vm283, %v299, %v300
      %v302 = vrot.slane %v253, 1
      %v303 = vrot.slane %v254, 1
      %v304 = vsel %vm283, %v302, %v303
      %v305 = vrot.slane %v255, 1
      %v306 = vrot.slane %v256, 1
      %v307 = vsel %vm283, %v305, %v306
      %v316 = vpack.c.bf16 %v289, %v286
      %v317 = vpack.c.bf16 %v295, %v292
      %v318 = vpack.c.bf16 %v301, %v298
      %v319 = vpack.c.bf16 %v307, %v304
      %s320 = scalar_lea.vmem %s1, 16
      %v321 = vld [vmem:[%s320] sm:$0xf]
      %v322 = vld [vmem:[%s320 + $0x4] sm:$0xf]
      %v323 = vld [vmem:[%s320 + $0x8] sm:$0xf]
      %v324 = vld [vmem:[%s320 + $0xc] sm:$0xf]
      %v329 = vunpack.c.l.b16 %v321
      %v330 = vunpack.c.l.b16 %v322
      %v331 = vunpack.c.l.b16 %v323
      %v332 = vunpack.c.l.b16 %v324
      %v333 = vpack.c.b16 %v330, %v329
      %v334 = vpack.c.b16 %v332, %v331
      %vm337 = vcmask 261120
      %v339 = vsel %vm337, %v316, 0
      %v342 = vsel %vm337, %v317, 0
      %v345 = vsel %vm337, %v318, 0
      %v348 = vsel %vm337, %v319, 0
      %350 = vmatprep.subr.bf16.mxu0 0
      %351 = vmatpush1.bf16.msra.mxu0 %v333
      %352 = vmatprep.subr.bf16.mxu0 0
      %353 = vmatpush1.bf16.msra.mxu0 %v334
      %354 = vmatprep.subr.bf16.mxu0 0
      %355 = vmatpush1.bf16.msra.mxu0 0
      %356 = vmatprep.subr.bf16.mxu0 0
      %357 = vmatpush1.bf16.msra.mxu0 0
      %358 = vmatprep.subr.bf16.mxu0 0
      %359 = vmatpush1.bf16.msra.mxu0 0
      %360 = vmatprep.subr.bf16.mxu0 0
      %361 = vmatpush1.bf16.msra.mxu0 0
      %362 = vmatprep.subr.bf16.mxu0 0
      %363 = vmatpush1.bf16.msra.mxu0 0
      %364 = vmatprep.subr.bf16.mxu0 0
      %365 = vmatpush1.bf16.msra.mxu0 0
      %366 = vmatprep.subr.bf16.mxu0 0
      %367 = vmatpush1.bf16.msra.mxu0 0
      %368 = vmatprep.subr.bf16.mxu0 0
      %369 = vmatpush1.bf16.msra.mxu0 0
      %370 = vmatprep.subr.bf16.mxu0 0
      %371 = vmatpush1.bf16.msra.mxu0 0
      %372 = vmatprep.subr.bf16.mxu0 0
      %373 = vmatpush1.bf16.msra.mxu0 0
      %374 = vmatprep.subr.bf16.mxu0 0
      %375 = vmatpush1.bf16.msra.mxu0 0
      %376 = vmatprep.subr.bf16.mxu0 0
      %377 = vmatpush1.bf16.msra.mxu0 0
      %378 = vmatprep.subr.bf16.mxu0 0
      %379 = vmatpush1.bf16.msra.mxu0 0
      %380 = vmatprep.subr.bf16.mxu0 0
      %381 = vmatpush1.bf16.msra.mxu0 0
      %382 = vmatprep.mubr.bf16.mxu0 0
      %383 = vmatmul.mubr.bf16.gmra.mrb[0].mxu0 %v339
      %v384 = vpop.f32.mrb[0].mxu0
      %v385 = vadd.f32 0.0, %v384
      %v386 = vpop.f32.mrb[0].mxu0
      %v387 = vpop.f32.mrb[0].mxu0
      %v388 = vadd.f32 0.0, %v387
      %v389 = vpop.f32.mrb[0].mxu0
      %390 = vmatprep.mubr.bf16.mxu0 0
      %391 = vmatmul.mubr.bf16.gmra.mrb[0].mxu0 %v342
      %v392 = vpop.f32.mrb[0].mxu0
      %v393 = vadd.f32 0.0, %v392
      %v394 = vpop.f32.mrb[0].mxu0
      %v395 = vpop.f32.mrb[0].mxu0
      %v396 = vadd.f32 0.0, %v395
      %v397 = vpop.f32.mrb[0].mxu0
      %398 = vmatprep.mubr.bf16.mxu0 0
      %399 = vmatmul.mubr.bf16.gmra.mrb[0].mxu0 %v345
      %v400 = vpop.f32.mrb[0].mxu0
      %v401 = vadd.f32 0.0, %v400
      %v402 = vpop.f32.mrb[0].mxu0
      %v403 = vpop.f32.mrb[0].mxu0
      %v404 = vadd.f32 0.0, %v403
      %v405 = vpop.f32.mrb[0].mxu0
      %406 = vmatprep.mubr.bf16.mxu0 0
      %407 = vmatmul.mubr.bf16.gmra.mrb[0].mxu0 %v348
      %v408 = vpop.f32.mrb[0].mxu0
      %v409 = vadd.f32 0.0, %v408
      %v410 = vpop.f32.mrb[0].mxu0
      %v411 = vpop.f32.mrb[0].mxu0
      %v412 = vadd.f32 0.0, %v411
      %v413 = vpop.f32.mrb[0].mxu0
      %414 = vdwg.mxu0
      %v419 = vunpack.c.l.b16 %v263
      %v420 = vunpack.c.l.b16 %v264
      %v421 = vunpack.c.l.b16 %v265
      %v422 = vunpack.c.l.b16 %v266
      %v423 = vpack.c.b16 %v420, %v419
      %v424 = vpack.c.b16 %v422, %v421
      %v428 = vsel %vm337, %v259, 0
      %v431 = vsel %vm337, %v260, 0
      %v434 = vsel %vm337, %v261, 0
      %v437 = vsel %vm337, %v262, 0
      %439 = vmatprep.subr.bf16.mxu0 0
      %440 = vmatpush1.bf16.msra.mxu0 %v423
      %441 = vmatprep.subr.bf16.mxu0 0
      %442 = vmatpush1.bf16.msra.mxu0 %v424
      %443 = vmatprep.subr.bf16.mxu0 0
      %444 = vmatpush1.bf16.msra.mxu0 0
      %445 = vmatprep.subr.bf16.mxu0 0
      %446 = vmatpush1.bf16.msra.mxu0 0
      %447 = vmatprep.subr.bf16.mxu0 0
      %448 = vmatpush1.bf16.msra.mxu0 0
      %449 = vmatprep.subr.bf16.mxu0 0
      %450 = vmatpush1.bf16.msra.mxu0 0
      %451 = vmatprep.subr.bf16.mxu0 0
      %452 = vmatpush1.bf16.msra.mxu0 0
      %453 = vmatprep.subr.bf16.mxu0 0
      %454 = vmatpush1.bf16.msra.mxu0 0
      %455 = vmatprep.subr.bf16.mxu0 0
      %456 = vmatpush1.bf16.msra.mxu0 0
      %457 = vmatprep.subr.bf16.mxu0 0
      %458 = vmatpush1.bf16.msra.mxu0 0
      %459 = vmatprep.subr.bf16.mxu0 0
      %460 = vmatpush1.bf16.msra.mxu0 0
      %461 = vmatprep.subr.bf16.mxu0 0
      %462 = vmatpush1.bf16.msra.mxu0 0
      %463 = vmatprep.subr.bf16.mxu0 0
      %464 = vmatpush1.bf16.msra.mxu0 0
      %465 = vmatprep.subr.bf16.mxu0 0
      %466 = vmatpush1.bf16.msra.mxu0 0
      %467 = vmatprep.subr.bf16.mxu0 0
      %468 = vmatpush1.bf16.msra.mxu0 0
      %469 = vmatprep.subr.bf16.mxu0 0
      %470 = vmatpush1.bf16.msra.mxu0 0
      %471 = vmatprep.mubr.bf16.mxu0 0
      %472 = vmatmul.mubr.bf16.gmra.mrb[0].mxu0 %v428
      %v473 = vpop.f32.mrb[0].mxu0
      %v474 = vadd.f32 %v385, %v473
      %v475 = vpop.f32.mrb[0].mxu0
      %v476 = vpop.f32.mrb[0].mxu0
      %v477 = vadd.f32 %v388, %v476
      %v478 = vpop.f32.mrb[0].mxu0
      %479 = vmatprep.mubr.bf16.mxu0 0
      %480 = vmatmul.mubr.bf16.gmra.mrb[0].mxu0 %v431
      %v481 = vpop.f32.mrb[0].mxu0
      %v482 = vadd.f32 %v393, %v481
      %v483 = vpop.f32.mrb[0].mxu0
      %v484 = vpop.f32.mrb[0].mxu0
      %v485 = vadd.f32 %v396, %v484
      %v486 = vpop.f32.mrb[0].mxu0
      %487 = vmatprep.mubr.bf16.mxu0 0
      %488 = vmatmul.mubr.bf16.gmra.mrb[0].mxu0 %v434
      %v489 = vpop.f32.mrb[0].mxu0
      %v490 = vadd.f32 %v401, %v489
      %v491 = vpop.f32.mrb[0].mxu0
      %v492 = vpop.f32.mrb[0].mxu0
      %v493 = vadd.f32 %v404, %v492
      %v494 = vpop.f32.mrb[0].mxu0
      %495 = vmatprep.mubr.bf16.mxu0 0
      %496 = vmatmul.mubr.bf16.gmra.mrb[0].mxu0 %v437
      %v497 = vpop.f32.mrb[0].mxu0
      %v498 = vadd.f32 %v409, %v497
      %v499 = vpop.f32.mrb[0].mxu0
      %v500 = vpop.f32.mrb[0].mxu0
      %v501 = vadd.f32 %v412, %v500
      %v502 = vpop.f32.mrb[0].mxu0
      %503 = vdwg.mxu0
      %v504 = vpack.c.bf16 %v245, %v243
      %v505 = vpack.c.bf16 %v249, %v247
      %v506 = vpack.c.bf16 %v253, %v251
      %v507 = vpack.c.bf16 %v257, %v255
      %s508 = scalar_lea.vmem %s1, 32
      %v509 = vld [vmem:[%s508] sm:$0xf]
      %v510 = vld [vmem:[%s508 + $0x4] sm:$0xf]
      %v511 = vld [vmem:[%s508 + $0x8] sm:$0xf]
      %v512 = vld [vmem:[%s508 + $0xc] sm:$0xf]
      %v517 = vunpack.c.l.b16 %v509
      %v518 = vunpack.c.l.b16 %v510
      %v519 = vunpack.c.l.b16 %v511
      %v520 = vunpack.c.l.b16 %v512
      %v521 = vpack.c.b16 %v518, %v517
      %v522 = vpack.c.b16 %v520, %v519
      %v526 = vsel %vm337, %v504, 0
      %v529 = vsel %vm337, %v505, 0
      %v532 = vsel %vm337, %v506, 0
      %v535 = vsel %vm337, %v507, 0
      %537 = vmatprep.subr.bf16.mxu0 0
      %538 = vmatpush1.bf16.msra.mxu0 %v521
      %539 = vmatprep.subr.bf16.mxu0 0
      %540 = vmatpush1.bf16.msra.mxu0 %v522
      %541 = vmatprep.subr.bf16.mxu0 0
      %542 = vmatpush1.bf16.msra.mxu0 0
      %543 = vmatprep.subr.bf16.mxu0 0
      %544 = vmatpush1.bf16.msra.mxu0 0
      %545 = vmatprep.subr.bf16.mxu0 0
      %546 = vmatpush1.bf16.msra.mxu0 0
      %547 = vmatprep.subr.bf16.mxu0 0
      %548 = vmatpush1.bf16.msra.mxu0 0
      %549 = vmatprep.subr.bf16.mxu0 0
      %550 = vmatpush1.bf16.msra.mxu0 0
      %551 = vmatprep.subr.bf16.mxu0 0
      %552 = vmatpush1.bf16.msra.mxu0 0
      %553 = vmatprep.subr.bf16.mxu0 0
      %554 = vmatpush1.bf16.msra.mxu0 0
      %555 = vmatprep.subr.bf16.mxu0 0
      %556 = vmatpush1.bf16.msra.mxu0 0
      %557 = vmatprep.subr.bf16.mxu0 0
      %558 = vmatpush1.bf16.msra.mxu0 0
      %559 = vmatprep.subr.bf16.mxu0 0
      %560 = vmatpush1.bf16.msra.mxu0 0
      %561 = vmatprep.subr.bf16.mxu0 0
      %562 = vmatpush1.bf16.msra.mxu0 0
      %563 = vmatprep.subr.bf16.mxu0 0
      %564 = vmatpush1.bf16.msra.mxu0 0
      %565 = vmatprep.subr.bf16.mxu0 0
      %566 = vmatpush1.bf16.msra.mxu0 0
      %567 = vmatprep.subr.bf16.mxu0 0
      %568 = vmatpush1.bf16.msra.mxu0 0
      %569 = vmatprep.mubr.bf16.mxu0 0
      %570 = vmatmul.mubr.bf16.gmra.mrb[0].mxu0 %v526
      %v571 = vpop.f32.mrb[0].mxu0
      %v572 = vadd.f32 0.0, %v571
      %v573 = vpop.f32.mrb[0].mxu0
      %v574 = vpop.f32.mrb[0].mxu0
      %v575 = vadd.f32 0.0, %v574
      %v576 = vpop.f32.mrb[0].mxu0
      %577 = vmatprep.mubr.bf16.mxu0 0
      %578 = vmatmul.mubr.bf16.gmra.mrb[0].mxu0 %v529
      %v579 = vpop.f32.mrb[0].mxu0
      %v580 = vadd.f32 0.0, %v579
      %v581 = vpop.f32.mrb[0].mxu0
      %v582 = vpop.f32.mrb[0].mxu0
      %v583 = vadd.f32 0.0, %v582
      %v584 = vpop.f32.mrb[0].mxu0
      %585 = vmatprep.mubr.bf16.mxu0 0
      %586 = vmatmul.mubr.bf16.gmra.mrb[0].mxu0 %v532
      %v587 = vpop.f32.mrb[0].mxu0
      %v588 = vadd.f32 0.0, %v587
      %v589 = vpop.f32.mrb[0].mxu0
      %v590 = vpop.f32.mrb[0].mxu0
      %v591 = vadd.f32 0.0, %v590
      %v592 = vpop.f32.mrb[0].mxu0
      %593 = vmatprep.mubr.bf16.mxu0 0
      %594 = vmatmul.mubr.bf16.gmra.mrb[0].mxu0 %v535
      %v595 = vpop.f32.mrb[0].mxu0
      %v596 = vadd.f32 0.0, %v595
      %v597 = vpop.f32.mrb[0].mxu0
      %v598 = vpop.f32.mrb[0].mxu0
      %v599 = vadd.f32 0.0, %v598
      %v600 = vpop.f32.mrb[0].mxu0
      %601 = vdwg.mxu0
      %v602 = vadd.f32 %v474, %v572
      %v603 = vadd.f32 %v477, %v575
      %v604 = vadd.f32 %v482, %v580
      %v605 = vadd.f32 %v485, %v583
      %v606 = vadd.f32 %v490, %v588
      %v607 = vadd.f32 %v493, %v591
      %v608 = vadd.f32 %v498, %v596
      %v609 = vadd.f32 %v501, %v599
      %v612 = vrot.slane %v257, 1
      %v613 = vrot.slane %v258, 1
      %v614 = vsel %vm283, %v612, %v613
      %v616 = vpack.c.bf16 %v292, %v289
      %v617 = vpack.c.bf16 %v298, %v295
      %v618 = vpack.c.bf16 %v304, %v301
      %v619 = vpack.c.bf16 %v614, %v307
      %s620 = scalar_lea.vmem %s1, 48
      %v621 = vld [vmem:[%s620] sm:$0xf]
      %v622 = vld [vmem:[%s620 + $0x4] sm:$0xf]
      %v623 = vld [vmem:[%s620 + $0x8] sm:$0xf]
      %v624 = vld [vmem:[%s620 + $0xc] sm:$0xf]
      %v629 = vunpack.c.l.b16 %v621
      %v630 = vunpack.c.l.b16 %v622
      %v631 = vunpack.c.l.b16 %v623
      %v632 = vunpack.c.l.b16 %v624
      %v633 = vpack.c.b16 %v630, %v629
      %v634 = vpack.c.b16 %v632, %v631
      %v638 = vsel %vm337, %v616, 0
      %v641 = vsel %vm337, %v617, 0
      %v644 = vsel %vm337, %v618, 0
      %v647 = vsel %vm337, %v619, 0
      %649 = vmatprep.subr.bf16.mxu0 0
      %650 = vmatpush1.bf16.msra.mxu0 %v633
      %651 = vmatprep.subr.bf16.mxu0 0
      %652 = vmatpush1.bf16.msra.mxu0 %v634
      %653 = vmatprep.subr.bf16.mxu0 0
      %654 = vmatpush1.bf16.msra.mxu0 0
      %655 = vmatprep.subr.bf16.mxu0 0
      %656 = vmatpush1.bf16.msra.mxu0 0
      %657 = vmatprep.subr.bf16.mxu0 0
      %658 = vmatpush1.bf16.msra.mxu0 0
      %659 = vmatprep.subr.bf16.mxu0 0
      %660 = vmatpush1.bf16.msra.mxu0 0
      %661 = vmatprep.subr.bf16.mxu0 0
      %662 = vmatpush1.bf16.msra.mxu0 0
      %663 = vmatprep.subr.bf16.mxu0 0
      %664 = vmatpush1.bf16.msra.mxu0 0
      %665 = vmatprep.subr.bf16.mxu0 0
      %666 = vmatpush1.bf16.msra.mxu0 0
      %667 = vmatprep.subr.bf16.mxu0 0
      %668 = vmatpush1.bf16.msra.mxu0 0
      %669 = vmatprep.subr.bf16.mxu0 0
      %670 = vmatpush1.bf16.msra.mxu0 0
      %671 = vmatprep.subr.bf16.mxu0 0
      %672 = vmatpush1.bf16.msra.mxu0 0
      %673 = vmatprep.subr.bf16.mxu0 0
      %674 = vmatpush1.bf16.msra.mxu0 0
      %675 = vmatprep.subr.bf16.mxu0 0
      %676 = vmatpush1.bf16.msra.mxu0 0
      %677 = vmatprep.subr.bf16.mxu0 0
      %678 = vmatpush1.bf16.msra.mxu0 0
      %679 = vmatprep.subr.bf16.mxu0 0
      %680 = vmatpush1.bf16.msra.mxu0 0
      %681 = vmatprep.mubr.bf16.mxu0 0
      %682 = vmatmul.mubr.bf16.gmra.mrb[0].mxu0 %v638
      %v683 = vpop.f32.mrb[0].mxu0
      %v684 = vadd.f32 0.0, %v683
      %v685 = vpop.f32.mrb[0].mxu0
      %v686 = vpop.f32.mrb[0].mxu0
      %v687 = vadd.f32 0.0, %v686
      %v688 = vpop.f32.mrb[0].mxu0
      %689 = vmatprep.mubr.bf16.mxu0 0
      %690 = vmatmul.mubr.bf16.gmra.mrb[0].mxu0 %v641
      %v691 = vpop.f32.mrb[0].mxu0
      %v692 = vadd.f32 0.0, %v691
      %v693 = vpop.f32.mrb[0].mxu0
      %v694 = vpop.f32.mrb[0].mxu0
      %v695 = vadd.f32 0.0, %v694
      %v696 = vpop.f32.mrb[0].mxu0
      %697 = vmatprep.mubr.bf16.mxu0 0
      %698 = vmatmul.mubr.bf16.gmra.mrb[0].mxu0 %v644
      %v699 = vpop.f32.mrb[0].mxu0
      %v700 = vadd.f32 0.0, %v699
      %v701 = vpop.f32.mrb[0].mxu0
      %v702 = vpop.f32.mrb[0].mxu0
      %v703 = vadd.f32 0.0, %v702
      %v704 = vpop.f32.mrb[0].mxu0
      %705 = vmatprep.mubr.bf16.mxu0 0
      %706 = vmatmul.mubr.bf16.gmra.mrb[0].mxu0 %v647
      %v707 = vpop.f32.mrb[0].mxu0
      %v708 = vadd.f32 0.0, %v707
      %v709 = vpop.f32.mrb[0].mxu0
      %v710 = vpop.f32.mrb[0].mxu0
      %v711 = vadd.f32 0.0, %v710
      %v712 = vpop.f32.mrb[0].mxu0
      %713 = vdwg.mxu0
      %v714 = vadd.f32 %v602, %v684
      %v715 = vadd.f32 %v603, %v687
      %v716 = vadd.f32 %v604, %v692
      %v717 = vadd.f32 %v605, %v695
      %v718 = vadd.f32 %v606, %v700
      %v719 = vadd.f32 %v607, %v703
      %v720 = vadd.f32 %v608, %v708
      %v721 = vadd.f32 %v609, %v711
      %v722 = vld [vmem:[%s2] sm:$0x1]
      %v724 = vlaneseq
      %v725 = vshrl.u32 %v724, 7
      %v726 = vsub.s32 0, %v725
      %v727 = vrot.slane %v722, %v726
      %v729 = vmul.f32 %v241, %v727
      %v730 = vmul.f32 %v243, %v727
      %v731 = vmul.f32 %v245, %v727
      %v732 = vmul.f32 %v247, %v727
      %v733 = vmul.f32 %v249, %v727
      %v734 = vmul.f32 %v251, %v727
      %v735 = vmul.f32 %v253, %v727
      %v736 = vmul.f32 %v255, %v727
      %v737 = vsel %vm337, %v729, 0.0
      %738 = vadd.xlane.f32.xlu0 %v737
      %v739 = vpop.xlane.xlu0 %738
      %v740 = vsel %vm337, %v730, 0.0
      %741 = vadd.xlane.f32.xlu0 %v740
      %v742 = vpop.xlane.xlu0 %741
      %v743 = vsel %vm337, %v731, 0.0
      %744 = vadd.xlane.f32.xlu0 %v743
      %v745 = vpop.xlane.xlu0 %744
      %v746 = vsel %vm337, %v732, 0.0
      %747 = vadd.xlane.f32.xlu0 %v746
      %v748 = vpop.xlane.xlu0 %747
      %v749 = vsel %vm337, %v733, 0.0
      %750 = vadd.xlane.f32.xlu0 %v749
      %v751 = vpop.xlane.xlu0 %750
      %v752 = vsel %vm337, %v734, 0.0
      %753 = vadd.xlane.f32.xlu0 %v752
      %v754 = vpop.xlane.xlu0 %753
      %v755 = vsel %vm337, %v735, 0.0
      %756 = vadd.xlane.f32.xlu0 %v755
      %v757 = vpop.xlane.xlu0 %756
      %v758 = vsel %vm337, %v736, 0.0
      %759 = vadd.xlane.f32.xlu0 %v758
      %v760 = vpop.xlane.xlu0 %759
      %vm761 = vcmp.gt.f32.partialorder %v739, 0.0
      %vm762 = vcmp.gt.f32.partialorder %v742, 0.0
      %vm763 = vcmp.gt.f32.partialorder %v745, 0.0
      %vm764 = vcmp.gt.f32.partialorder %v748, 0.0
      %vm765 = vcmp.gt.f32.partialorder %v751, 0.0
      %vm766 = vcmp.gt.f32.partialorder %v754, 0.0
      %vm767 = vcmp.gt.f32.partialorder %v757, 0.0
      %vm768 = vcmp.gt.f32.partialorder %v760, 0.0
      %v769 = vmul.f32 %v739, 0.1
      %v770 = vmul.f32 %v742, 0.1
      %v771 = vmul.f32 %v745, 0.1
      %v772 = vmul.f32 %v748, 0.1
      %v773 = vmul.f32 %v751, 0.1
      %v774 = vmul.f32 %v754, 0.1
      %v775 = vmul.f32 %v757, 0.1
      %v776 = vmul.f32 %v760, 0.1
      %v777 = vsel %vm761, %v739, %v769
      %v778 = vsel %vm762, %v742, %v770
      %v779 = vsel %vm763, %v745, %v771
      %v780 = vsel %vm764, %v748, %v772
      %v781 = vsel %vm765, %v751, %v773
      %v782 = vsel %vm766, %v754, %v774
      %v783 = vsel %vm767, %v757, %v775
      %v784 = vsel %vm768, %v760, %v776
      %v785 = vld [vmem:[%s3] sm:$0xf]
      %v786 = vld [vmem:[%s3 + $0x4] sm:$0xf]
      %v787 = vld [vmem:[%s3 + $0x8] sm:$0xf]
      %v788 = vld [vmem:[%s3 + $0xc] sm:$0xf]
      %v793 = vunpack.c.l.b16 %v785
      %v794 = vunpack.c.l.b16 %v786
      %v795 = vunpack.c.l.b16 %v787
      %v796 = vunpack.c.l.b16 %v788
      %v797 = vpack.c.b16 %v794, %v793
      %v798 = vpack.c.b16 %v796, %v795
      %801 = vmatprep.subr.bf16.mxu0 0
      %802 = vmatpush1.bf16.msra.mxu0 %v797
      %803 = vmatprep.subr.bf16.mxu0 0
      %804 = vmatpush1.bf16.msra.mxu0 %v798
      %805 = vmatprep.subr.bf16.mxu0 0
      %806 = vmatpush1.bf16.msra.mxu0 0
      %807 = vmatprep.subr.bf16.mxu0 0
      %808 = vmatpush1.bf16.msra.mxu0 0
      %809 = vmatprep.subr.bf16.mxu0 0
      %810 = vmatpush1.bf16.msra.mxu0 0
      %811 = vmatprep.subr.bf16.mxu0 0
      %812 = vmatpush1.bf16.msra.mxu0 0
      %813 = vmatprep.subr.bf16.mxu0 0
      %814 = vmatpush1.bf16.msra.mxu0 0
      %815 = vmatprep.subr.bf16.mxu0 0
      %816 = vmatpush1.bf16.msra.mxu0 0
      %817 = vmatprep.subr.bf16.mxu0 0
      %818 = vmatpush1.bf16.msra.mxu0 0
      %819 = vmatprep.subr.bf16.mxu0 0
      %820 = vmatpush1.bf16.msra.mxu0 0
      %821 = vmatprep.subr.bf16.mxu0 0
      %822 = vmatpush1.bf16.msra.mxu0 0
      %823 = vmatprep.subr.bf16.mxu0 0
      %824 = vmatpush1.bf16.msra.mxu0 0
      %825 = vmatprep.subr.bf16.mxu0 0
      %826 = vmatpush1.bf16.msra.mxu0 0
      %827 = vmatprep.subr.bf16.mxu0 0
      %828 = vmatpush1.bf16.msra.mxu0 0
      %829 = vmatprep.subr.bf16.mxu0 0
      %830 = vmatpush1.bf16.msra.mxu0 0
      %831 = vmatprep.subr.bf16.mxu0 0
      %832 = vmatpush1.bf16.msra.mxu0 0
      %833 = vmatprep.mubr.bf16.mxu0 0
      %834 = vmatmul.mubr.bf16.gmra.mrb[0].mxu0 %v428
      %v835 = vpop.f32.mrb[0].mxu0
      %v836 = vadd.f32 0.0, %v835
      %v837 = vpop.f32.mrb[0].mxu0
      %v838 = vpop.f32.mrb[0].mxu0
      %v839 = vadd.f32 0.0, %v838
      %v840 = vpop.f32.mrb[0].mxu0
      %841 = vmatprep.mubr.bf16.mxu0 0
      %842 = vmatmul.mubr.bf16.gmra.mrb[0].mxu0 %v431
      %v843 = vpop.f32.mrb[0].mxu0
      %v844 = vadd.f32 0.0, %v843
      %v845 = vpop.f32.mrb[0].mxu0
      %v846 = vpop.f32.mrb[0].mxu0
      %v847 = vadd.f32 0.0, %v846
      %v848 = vpop.f32.mrb[0].mxu0
      %849 = vmatprep.mubr.bf16.mxu0 0
      %850 = vmatmul.mubr.bf16.gmra.mrb[0].mxu0 %v434
      %v851 = vpop.f32.mrb[0].mxu0
      %v852 = vadd.f32 0.0, %v851
      %v853 = vpop.f32.mrb[0].mxu0
      %v854 = vpop.f32.mrb[0].mxu0
      %v855 = vadd.f32 0.0, %v854
      %v856 = vpop.f32.mrb[0].mxu0
      %857 = vmatprep.mubr.bf16.mxu0 0
      %858 = vmatmul.mubr.bf16.gmra.mrb[0].mxu0 %v437
      %v859 = vpop.f32.mrb[0].mxu0
      %v860 = vadd.f32 0.0, %v859
      %v861 = vpop.f32.mrb[0].mxu0
      %v862 = vpop.f32.mrb[0].mxu0
      %v863 = vadd.f32 0.0, %v862
      %v864 = vpop.f32.mrb[0].mxu0
      %865 = vdwg.mxu0
      %v866 = vmul.f32 %v777, %v836
      %v867 = vmul.f32 %v778, %v839
      %v868 = vmul.f32 %v779, %v844
      %v869 = vmul.f32 %v780, %v847
      %v870 = vmul.f32 %v781, %v852
      %v871 = vmul.f32 %v782, %v855
      %v872 = vmul.f32 %v783, %v860
      %v873 = vmul.f32 %v784, %v863
      %v874 = vadd.f32 %v714, %v866
      %v875 = vadd.f32 %v715, %v867
      %v876 = vadd.f32 %v716, %v868
      %v877 = vadd.f32 %v717, %v869
      %v878 = vadd.f32 %v718, %v870
      %v879 = vadd.f32 %v719, %v871
      %v880 = vadd.f32 %v720, %v872
      %v881 = vadd.f32 %v721, %v873
      %vm882 = vcmp.gt.f32.partialorder %v874, 0.0
      %vm883 = vcmp.gt.f32.partialorder %v875, 0.0
      %vm884 = vcmp.gt.f32.partialorder %v876, 0.0
      %vm885 = vcmp.gt.f32.partialorder %v877, 0.0
      %vm886 = vcmp.gt.f32.partialorder %v878, 0.0
      %vm887 = vcmp.gt.f32.partialorder %v879, 0.0
      %vm888 = vcmp.gt.f32.partialorder %v880, 0.0
      %vm889 = vcmp.gt.f32.partialorder %v881, 0.0
      %v890 = vmul.f32 %v874, 0.1
      %v891 = vmul.f32 %v875, 0.1
      %v892 = vmul.f32 %v876, 0.1
      %v893 = vmul.f32 %v877, 0.1
      %v894 = vmul.f32 %v878, 0.1
      %v895 = vmul.f32 %v879, 0.1
      %v896 = vmul.f32 %v880, 0.1
      %v897 = vmul.f32 %v881, 0.1
      %v898 = vsel %vm882, %v874, %v890
      %v899 = vsel %vm883, %v875, %v891
      %v900 = vsel %vm884, %v876, %v892
      %v901 = vsel %vm885, %v877, %v893
      %v902 = vsel %vm886, %v878, %v894
      %v903 = vsel %vm887, %v879, %v895
      %v904 = vsel %vm888, %v880, %v896
      %v905 = vsel %vm889, %v881, %v897
      %vm906 = vcmask 326656
      %907 = vst.msk [vmem:[%s238] sm:$0xff] %vm906, %v898
      %908 = vst.msk [vmem:[%s238 + $0x8] sm:$0xff] %vm906, %v899
      %909 = vst.msk [vmem:[%s238 + $0x10] sm:$0xff] %vm906, %v900
      %910 = vst.msk [vmem:[%s238 + $0x18] sm:$0xff] %vm906, %v901
      %911 = vst.msk [vmem:[%s238 + $0x20] sm:$0xff] %vm906, %v902
      %912 = vst.msk [vmem:[%s238 + $0x28] sm:$0xff] %vm906, %v903
      %913 = vst.msk [vmem:[%s238 + $0x30] sm:$0xff] %vm906, %v904
      %914 = vst.msk [vmem:[%s238 + $0x38] sm:$0xff] %vm906, %v905
      %s915 = smul.u32 8, %s20
      %p916 = scmp.lt.s32.totalorder %s19, 1
      %s917 = scalar_select %p916, %s19, 1
      %p918 = scmp.lt.s32.totalorder %s915, 7
      %s919 = scalar_select %p918, %s915, 7
      %s920 = smul.addr %s917, 8
      %s921 = sadd.s32 %s919, %s920
      %s922 = smul.addr %s921, 8
      %s923 = scalar_lea.vmem %s4, %s922
      // Predicated region
      $region37: #{calibrated_backprojection_block.1} parent=35 // pred_check
        %p924 = pneg %p138
      $region38: #{calibrated_backprojection_block.1} parent=35 // pred_check_branch
        %926 = sbr.rel (%p924) target = $region40
      $region39: #{calibrated_backprojection_block.1} parent=35 // pred_region
        %s927 = smul.u32 8, %s20
      $region40: #{calibrated_backprojection_block.1} parent=35 // pred_fallthru
        _
    $region36: #{calibrated_backprojection_block.1} parent=5 // pred_fallthru
      _
    %p928 = scmp.le.s32.totalorder 2, %s10
    // Predicated region
    $region41: #{calibrated_backprojection_block.1} parent=5 // pred_check
      %p929 = pneg %p928
    $region42: #{calibrated_backprojection_block.1} parent=5 // pred_check_branch
      %931 = sbr.rel (%p929) target = $region44
    $region43: #{calibrated_backprojection_block.1} parent=5 // pred_region
      %s932 = ssub.s32 %s10, 2
      // Predicated region
      $region45: #{calibrated_backprojection_block.1} parent=43 // pred_check
        %p933 = pneg %p144
      $region46: #{calibrated_backprojection_block.1} parent=43 // pred_check_branch
        %935 = sbr.rel (%p933) target = $region48
      $region47: #{calibrated_backprojection_block.1} parent=43 // pred_region
        %s936 = smul.u32 8, %s22
        %p937 = scmp.lt.s32.totalorder %s21, 1
        %s938 = scalar_select %p937, %s21, 1
        %p939 = scmp.lt.s32.totalorder %s936, 7
        %s940 = scalar_select %p939, %s936, 7
        %s941 = smul.addr %s938, 8
        %s942 = sadd.s32 %s940, %s941
        %s943 = smul.addr %s942, 8
        %s944 = scalar_lea.vmem %s4, %s943
      $region48: #{calibrated_backprojection_block.1} parent=43 // pred_fallthru
        _
    $region44: #{calibrated_backprojection_block.1} parent=5 // pred_fallthru
      _
  $region6: #{calibrated_backprojection_block.1} parent=0 // loop_footer
    %s14 = sadd.s32 1, %s10
  $region7: #{calibrated_backprojection_block.1} parent=0 // loop_footer_branch
    %9 = sbr.rel target = $region3
  $region8: #{calibrated_backprojection_block.1} parent=0 // loop_exit
    _

</llo_original>
